<compile_context>
chip_gen: v6e
topology: v6e:2x2x1
jax: 0.10.0
libtpu: 0.0.40
codegen_flags: <defaults>
</compile_context>

<pallas_src>
import functools

import jax
import jax.numpy as jnp
from jax.experimental import pallas as pl
from jax.experimental.pallas import tpu as pltpu

LAMBDA_ = 0.3
N_CLASSES = 7


def _bce_partial_kernel(pred_ref, tgt_ref, out_ref, *,
                        batch, tile_rows, tiles_per_shard):
    """Accumulate per-(sublane, lane) partial sums of BCE-with-logits into out_ref."""
    s = pl.program_id(0)   # "parallel" shard axis (megacore on v7x)
    i = pl.program_id(1)   # "arbitrary" reduction axis

    @pl.when(i == 0)
    def _():
        out_ref[...] = jnp.zeros_like(out_ref)

    x = pred_ref[...].astype(jnp.float32)
    z = tgt_ref[...].astype(jnp.float32)

    # Numerically stable BCE-with-logits (same formula PyTorch uses):
    #   l = max(x, 0) - x*z + log(1 + exp(-|x|))
    per = jnp.maximum(x, 0.0) - x * z + jnp.log1p(jnp.exp(-jnp.abs(x)))

    nc = per.shape[-1]

    def accumulate(vals):
        # (tile_rows, nc) -> (tile_rows//8, 8, nc) splits exactly at the vreg
        # boundary (trivial relayout); the axis-0 sum is pure VALU vreg adds,
        # so there is no XLU work in the hot loop.
        out_ref[...] += jnp.sum(vals.reshape(tile_rows // 8, 8, nc), axis=0)

    # First batch row covered by this tile (int32; safe for batch < 2**31 rows
    # since the compare is on row indices, not flattened element indices).
    row0 = (s * tiles_per_shard + i) * tile_rows
    in_bounds = row0 + tile_rows <= batch

    @pl.when(in_bounds)
    def _():
        # Hot path: no masking work at all.
        accumulate(per)

    @pl.when(jnp.logical_not(in_bounds))
    def _():
        # Only the final (ragged) tile pays for the mask.  Must stay a select:
        # the out-of-bounds rows of the block hold unspecified data.
        ridx = jax.lax.broadcasted_iota(jnp.int32, per.shape, 0) + row0
        accumulate(jnp.where(ridx < batch, per, 0.0))


def _chip_defaults():
    """Generation-dependent (tile_rows, num_shards)."""
    try:
        kind = jax.devices()[0].device_kind.lower()
    except Exception:  # pragma: no cover - interpret mode / unknown backend
        kind = ""
    if "v7" in kind:   # 2 TensorCores, 64 MiB VMEM, 3.2 TB/s HBM: big blocks + megacore
        return 16384, 2
    if "v6" in kind:   # single TC, 32 MiB default scoped VMEM
        return 8192, 1
    return 4096, 1     # v5e & fallback: 16 MiB default scoped VMEM -> <=2 MiB blocks


def resnet_loss(prediction: jax.Array, target: jax.Array, *,
                tile_rows: int | None = None,
                num_shards: int | None = None) -> jax.Array:
    """Scalar f32 loss matching ResNet_loss.forward (mean BCEWithLogitsLoss, cond. * 0.3)."""
    assert prediction.shape == target.shape and prediction.ndim == 2
    batch, n_classes = (int(d) for d in prediction.shape)
    n = batch * n_classes

    auto_rows, auto_shards = _chip_defaults()
    tile_rows = auto_rows if tile_rows is None else int(tile_rows)
    num_shards = auto_shards if num_shards is None else int(num_shards)

    # Hoisted lambda condition: reads only target[0, :3]; stays in plain JAX.
    scale = jnp.where(jnp.any(target[0, :3] == 1),
                      jnp.float32(LAMBDA_), jnp.float32(1.0))

    # Tile over batch rows only (no flatten / pad / slice of the inputs).
    tile_rows = min(tile_rows, ((batch + 7) // 8) * 8)
    tile_rows = max(8, (tile_rows // 8) * 8)
    total_tiles = -(-batch // tile_rows)

    shards = num_shards
    if shards < 1 or total_tiles < 2 * shards or total_tiles % shards:
        shards = 1   # keep every grid tile at least partially in-bounds
    tiles_per_shard = total_tiles // shards

    kernel = functools.partial(_bce_partial_kernel, batch=batch,
                               tile_rows=tile_rows, tiles_per_shard=tiles_per_shard)

    # VMEM budget: each (tile_rows, n_classes) f32 block is lane-padded to 128
    # lanes in VMEM -> tile_rows * 512 bytes; 2 inputs x double buffer.
    block_bytes = tile_rows * 128 * 4
    vmem_need = 2 * 2 * block_bytes + (1 << 20)
    cp = dict(dimension_semantics=("parallel", "arbitrary"))
    if vmem_need > (12 << 20):
        cp["vmem_limit_bytes"] = vmem_need + (8 << 20)

    in_map = lambda s, i: (s * tiles_per_shard + i, 0)
    partials = pl.pallas_call(
        kernel,
        out_shape=jax.ShapeDtypeStruct((shards * 8, n_classes), jnp.float32),
        grid=(shards, tiles_per_shard),
        in_specs=[pl.BlockSpec((tile_rows, n_classes), in_map),
                  pl.BlockSpec((tile_rows, n_classes), in_map)],
        out_specs=pl.BlockSpec((8, n_classes), lambda s, i: (s, 0)),
        compiler_params=pltpu.CompilerParams(**cp),
    )(prediction, target)

    # Final cross-lane reduce + mean + conditional lambda: tiny, plain JAX.
    return scale * (jnp.sum(partials) / n)


def _reference_loss(prediction, target):
    # Pure-JAX reference for sanity checking.
    x = prediction.astype(jnp.float32)
    z = target.astype(jnp.float32)
    per = jnp.maximum(x, 0.0) - x * z + jnp.log1p(jnp.exp(-jnp.abs(x)))
    loss = jnp.mean(per)
    cond = (z[0, 0] == 1) | (z[0, 1] == 1) | (z[0, 2] == 1)
    return jnp.where(cond, LAMBDA_ * loss, loss)


if __name__ == "__main__":
    key = jax.random.PRNGKey(0)
    k1, k2, k3 = jax.random.split(key, 3)

    # --- Module-natural shape: batch=2, n_classes=7 ---
    batch = 2
    prediction = jax.random.normal(k1, (batch, N_CLASSES), dtype=jnp.float32)

    # First row hits class 1 -> lambda (0.3) branch.
    target_a = jnp.zeros((batch, N_CLASSES), jnp.float32).at[0, 1].set(1.0).at[1, 4].set(1.0)
    # First row active class >= 3 -> unscaled branch.
    target_b = jnp.zeros((batch, N_CLASSES), jnp.float32).at[0, 5].set(1.0).at[1, 6].set(1.0)

    out_a = jax.block_until_ready(resnet_loss(prediction, target_a))
    out_b = jax.block_until_ready(resnet_loss(prediction, target_b))
    assert jnp.allclose(out_a, _reference_loss(prediction, target_a), rtol=1e-5, atol=1e-6)
    assert jnp.allclose(out_b, _reference_loss(prediction, target_b), rtol=1e-5, atol=1e-6)

    # --- Multi-tile case: exercises the (parallel, arbitrary) grid, the resident
    #     per-shard accumulator, and the pl.when-gated ragged-tile mask.
    #     (tile_rows=256, num_shards=2 -> grid (2, 4), last tile ragged.) ---
    batch_m = 2000
    pred_m = jax.random.normal(k2, (batch_m, N_CLASSES), dtype=jnp.float32)
    tgt_m = (jax.random.uniform(k3, (batch_m, N_CLASSES)) < 0.3).astype(jnp.float32)
    out_m = jax.block_until_ready(resnet_loss(pred_m, tgt_m, tile_rows=256, num_shards=2))
    assert jnp.allclose(out_m, _reference_loss(pred_m, tgt_m), rtol=1e-4, atol=1e-6)

    print("KERNEL_OK")
</pallas_src>

<mosaic_0001>
module attributes {stable_mosaic.version = 11 : i64} {
  func.func @_bce_partial_kernel(%arg0: i32, %arg1: i32, %arg2: memref<8x7xf32, #tpu.memory_space<vmem>>, %arg3: memref<8x7xf32, #tpu.memory_space<vmem>>, %arg4: memref<8x7xf32, #tpu.memory_space<vmem>>) attributes {dimension_semantics = [#tpu.dimension_semantics<parallel>, #tpu.dimension_semantics<arbitrary>], iteration_bounds = array<i64: 1, 1>, scalar_prefetch = 0 : i64, scratch_operands = 0 : i64, tpu.core_type = #tpu.core_type<tc>, window_params = [{transform_indices = @transform_0, window_bounds = array<i64: 8, 7>}, {transform_indices = @transform_1, window_bounds = array<i64: 8, 7>}, {transform_indices = @transform_2, window_bounds = array<i64: 8, 7>}]} {
    %c0_i32 = arith.constant 0 : i32
    %0 = arith.cmpi eq, %arg1, %c0_i32 : i32
    %1 = arith.extui %0 : i1 to i32
    %c0_i32_0 = arith.constant 0 : i32
    %2 = arith.cmpi ne, %1, %c0_i32_0 : i32
    scf.if %2 {
      %cst_8 = arith.constant 0.000000e+00 : f32
      %25 = vector.broadcast %cst_8 : f32 to vector<8x7xf32>
      %c0_9 = arith.constant 0 : index
      %c0_10 = arith.constant 0 : index
      %26 = vector.load %arg4[%c0_9, %c0_10] : memref<8x7xf32, #tpu.memory_space<vmem>>, vector<8x7xf32>
      tpu.vector_store %arg4[%c0_9, %c0_10], %25 {strides = array<i32>} : memref<8x7xf32, #tpu.memory_space<vmem>>, vector<8x7xf32>,
    } else {
    }
    %c0 = arith.constant 0 : index
    %c0_1 = arith.constant 0 : index
    %3 = vector.load %arg2[%c0, %c0_1] : memref<8x7xf32, #tpu.memory_space<vmem>>, vector<8x7xf32>
    %c0_2 = arith.constant 0 : index
    %c0_3 = arith.constant 0 : index
    %4 = vector.load %arg3[%c0_2, %c0_3] : memref<8x7xf32, #tpu.memory_space<vmem>>, vector<8x7xf32>
    %cst = arith.constant 0.000000e+00 : f32
    %5 = vector.broadcast %cst : f32 to vector<8x7xf32>
    %6 = arith.maximumf %3, %5 : vector<8x7xf32>
    %7 = arith.mulf %3, %4 : vector<8x7xf32>
    %8 = arith.subf %6, %7 : vector<8x7xf32>
    %9 = math.absf %3 : vector<8x7xf32>
    %cst_4 = arith.constant 0.000000e+00 : f32
    %10 = vector.broadcast %cst_4 : f32 to vector<8x7xf32>
    %11 = arith.subf %10, %9 : vector<8x7xf32>
    %12 = math.exp %11 : vector<8x7xf32>
    %13 = math.log1p %12 : vector<8x7xf32>
    %14 = arith.addf %8, %13 : vector<8x7xf32>
    %c1_i32 = arith.constant 1 : i32
    %15 = arith.muli %arg0, %c1_i32 : i32
    %16 = arith.addi %15, %arg1 : i32
    %c8_i32 = arith.constant 8 : i32
    %17 = arith.muli %16, %c8_i32 : i32
    %c8_i32_5 = arith.constant 8 : i32
    %18 = arith.addi %17, %c8_i32_5 : i32
    %c2_i32 = arith.constant 2 : i32
    %19 = arith.cmpi sle, %18, %c2_i32 : i32
    %20 = arith.extui %19 : i1 to i32
    %c0_i32_6 = arith.constant 0 : i32
    %21 = arith.cmpi ne, %20, %c0_i32_6 : i32
    scf.if %21 {
      %c0_8 = arith.constant 0 : index
      %c0_9 = arith.constant 0 : index
      %25 = vector.load %arg4[%c0_8, %c0_9] : memref<8x7xf32, #tpu.memory_space<vmem>>, vector<8x7xf32>
      %26 = vector.shape_cast %14 : vector<8x7xf32> to vector<1x8x7xf32>
      %cst_10 = arith.constant dense<0.000000e+00> : vector<8x7xf32>
      %27 = vector.multi_reduction <add>, %26, %cst_10 [0] : vector<1x8x7xf32> to vector<8x7xf32>
      %28 = arith.addf %25, %27 : vector<8x7xf32>
      %c0_11 = arith.constant 0 : index
      %c0_12 = arith.constant 0 : index
      %29 = vector.load %arg4[%c0_11, %c0_12] : memref<8x7xf32, #tpu.memory_space<vmem>>, vector<8x7xf32>
      tpu.vector_store %arg4[%c0_11, %c0_12], %28 {strides = array<i32>} : memref<8x7xf32, #tpu.memory_space<vmem>>, vector<8x7xf32>,
    } else {
    }
    %true = arith.constant true
    %22 = arith.xori %19, %true : i1
    %23 = arith.extui %22 : i1 to i32
    %c0_i32_7 = arith.constant 0 : i32
    %24 = arith.cmpi ne, %23, %c0_i32_7 : i32
    scf.if %24 {
      %25 = tpu.iota {dimensions = array<i32: 0>} : vector<8x7xi32>
      %26 = vector.broadcast %17 : i32 to vector<8x7xi32>
      %27 = arith.addi %25, %26 : vector<8x7xi32>
      %c2_i32_8 = arith.constant 2 : i32
      %28 = vector.broadcast %c2_i32_8 : i32 to vector<8x7xi32>
      %29 = arith.cmpi slt, %27, %28 : vector<8x7xi32>
      %cst_9 = arith.constant 0.000000e+00 : f32
      %30 = vector.broadcast %cst_9 : f32 to vector<8x7xf32>
      %31 = arith.select %29, %14, %30 : vector<8x7xi1>, vector<8x7xf32>
      %c0_10 = arith.constant 0 : index
      %c0_11 = arith.constant 0 : index
      %32 = vector.load %arg4[%c0_10, %c0_11] : memref<8x7xf32, #tpu.memory_space<vmem>>, vector<8x7xf32>
      %33 = vector.shape_cast %31 : vector<8x7xf32> to vector<1x8x7xf32>
      %cst_12 = arith.constant dense<0.000000e+00> : vector<8x7xf32>
      %34 = vector.multi_reduction <add>, %33, %cst_12 [0] : vector<1x8x7xf32> to vector<8x7xf32>
      %35 = arith.addf %32, %34 : vector<8x7xf32>
      %c0_13 = arith.constant 0 : index
      %c0_14 = arith.constant 0 : index
      %36 = vector.load %arg4[%c0_13, %c0_14] : memref<8x7xf32, #tpu.memory_space<vmem>>, vector<8x7xf32>
      tpu.vector_store %arg4[%c0_13, %c0_14], %35 {strides = array<i32>} : memref<8x7xf32, #tpu.memory_space<vmem>>, vector<8x7xf32>,
    } else {
    }
    return
  }
  func.func @transform_0(%arg0: i32, %arg1: i32) -> (i32, i32) {
    %c1_i32 = arith.constant 1 : i32
    %0 = arith.muli %arg0, %c1_i32 : i32
    %1 = arith.addi %0, %arg1 : i32
    %c0_i32 = arith.constant 0 : i32
    %c0_i32_0 = arith.constant 0 : i32
    return %1, %c0_i32 : i32, i32
  }
  func.func @transform_1(%arg0: i32, %arg1: i32) -> (i32, i32) {
    %c1_i32 = arith.constant 1 : i32
    %0 = arith.muli %arg0, %c1_i32 : i32
    %1 = arith.addi %0, %arg1 : i32
    %c0_i32 = arith.constant 0 : i32
    %c0_i32_0 = arith.constant 0 : i32
    return %1, %c0_i32 : i32, i32
  }
  func.func @transform_2(%arg0: i32, %arg1: i32) -> (i32, i32) {
    %c0_i32 = arith.constant 0 : i32
    %c0_i32_0 = arith.constant 0 : i32
    return %arg0, %c0_i32 : i32, i32
  }
}

</mosaic_0001>

<llo_original>
// kernel: tpu_custom_call.1
$region0: #{tpu_custom_call.1}
  #allocation0 [shape = 'u32[]', space=smem, size = 0x4, offset = 0x4, fixed_abs, tag = 'smem constant byte address 0x4 - core index']
  #allocation1 [shape = 'u32[144,128]{1,0:T(1,128)}', space=vmem, size = 0x12000, scoped, tag = 'internal scratch']
  %s0 = inlined_call_operand.hbm [shape: f32[2,7], index: 0, kind: input, shape index: {}]
  %s1 = inlined_call_operand.hbm [shape: f32[2,7], index: 1, kind: input, shape index: {}]
  %s2 = inlined_call_operand.hbm [shape: f32[8,7], index: 2, kind: output, shape index: {}]
  %s3 = sld [smem:[#allocation0]]
  $region38: #{tpu_custom_call.1} parent=0
    _
  %s5 = ssub.s32 1, %s3
  %s6 = scalar_select 0, %s5, %s3
  $region1: #{tpu_custom_call.1} parent=0
    #allocation2 [shape = 'u8[4096]{0}', space=vmem, size = 0x1000, scoped, tag = 'input window, operand 0, single buffered']
    #allocation3 [shape = 's32[1]{0}', space=sflag, size = 0x4, scoped, tag = 'scoped memory for tpu_custom_call.1']
    #allocation4 [shape = 's32[1]{0}', space=sflag, size = 0x4, scoped, tag = 'scoped memory for tpu_custom_call.1']
    #allocation5 [shape = 'u8[4096]{0}', space=vmem, size = 0x1000, scoped, tag = 'input window, operand 1, single buffered']
    #allocation6 [shape = 's32[1]{0}', space=sflag, size = 0x4, scoped, tag = 'scoped memory for tpu_custom_call.1']
    #allocation7 [shape = 'u8[4096]{0}', space=vmem, size = 0x1000, scoped, tag = 'output window, operand 0, single buffered']
    %7 = vsyncpa [#allocation3], 0
    %8 = vsyncpa [#allocation6], 0
    %9 = vsyncpa [#allocation4], 0
    // Predicated region
    $region2: #{tpu_custom_call.1} parent=1 // pred_check
      _
    $region3: #{tpu_custom_call.1} parent=1 // pred_check_branch
      %11 = sbr.rel (0) target = $region5
    $region4: #{tpu_custom_call.1} parent=1 // pred_region
      %s12 = sadd.s32 0, 0
      %s13 = smul.u32 4, %s12
      %s14 = ssub.s32 1, %s13
      %s15 = smul.u32 32, %s14
      %s17 = ssub.s32 128, %s15
      %18 = vsyncadd [#allocation3], %s17
      %p19 = scmp.ne.s32.totalorder 0, %s15
      %s20 = smul.addr %s13, 32
      %s21 = scalar_lea.hbm %s0, %s20
      %s22 = smul.u32 2, %s14
      %s23 = sshll.u32 [#allocation2], 4
      %s24 = int_to_ptr.vmem [resolvable:$true] %s23
      %s25 = sshll.u32 %s22, 4
      %29 = dma.hbm_to_vmem [thread:$0]  (%p19), %s21, %s25, %s24, [#allocation3], 32, 32, 2
    $region5: #{tpu_custom_call.1} parent=1 // pred_fallthru
      _
    // Predicated region
    $region6: #{tpu_custom_call.1} parent=1 // pred_check
      _
    $region7: #{tpu_custom_call.1} parent=1 // pred_check_branch
      %31 = sbr.rel (0) target = $region9
    $region8: #{tpu_custom_call.1} parent=1 // pred_region
      %s32 = sadd.s32 0, 0
      %s33 = smul.u32 4, %s32
      %s34 = ssub.s32 1, %s33
      %s35 = smul.u32 32, %s34
      %s37 = ssub.s32 128, %s35
      %38 = vsyncadd [#allocation6], %s37
      %p39 = scmp.ne.s32.totalorder 0, %s35
      %s40 = smul.addr %s33, 32
      %s41 = scalar_lea.hbm %s1, %s40
      %s42 = smul.u32 2, %s34
      %s43 = sshll.u32 [#allocation5], 4
      %s44 = int_to_ptr.vmem [resolvable:$true] %s43
      %s45 = sshll.u32 %s42, 4
      %49 = dma.hbm_to_vmem [thread:$0]  (%p39), %s41, %s45, %s44, [#allocation6], 32, 32, 2
    $region9: #{tpu_custom_call.1} parent=1 // pred_fallthru
      _
    // Predicated region
    $region10: #{tpu_custom_call.1} parent=1 // pred_check
      _
    $region11: #{tpu_custom_call.1} parent=1 // pred_check_branch
      %51 = sbr.rel (0) target = $region13
    $region12: #{tpu_custom_call.1} parent=1 // pred_region
      %52 = dma.done [#allocation3], 128
    $region13: #{tpu_custom_call.1} parent=1 // pred_fallthru
      _
    // Predicated region
    $region14: #{tpu_custom_call.1} parent=1 // pred_check
      _
    $region15: #{tpu_custom_call.1} parent=1 // pred_check_branch
      %54 = sbr.rel (0) target = $region17
    $region16: #{tpu_custom_call.1} parent=1 // pred_region
      %55 = dma.done [#allocation6], 128
    $region17: #{tpu_custom_call.1} parent=1 // pred_fallthru
      _
    %s56 = sadd.s32 0, 0
    %s57 = smul.u32 4, %s56
    %s58 = ssub.s32 1, %s57
    %s59 = smul.u32 32, %s58
    %s60 = sadd.s32 0, 0
    %s61 = smul.u32 4, %s60
    %s62 = ssub.s32 1, %s61
    %s63 = smul.u32 32, %s62
    %p64 = scmp.eq.s32.totalorder 0, 0
    // Predicated region
    $region18: #{tpu_custom_call.1} parent=1 // pred_check
      %p65 = pneg %p64
    $region19: #{tpu_custom_call.1} parent=1 // pred_check_branch
      %67 = sbr.rel (%p65) target = $region21
    $region20: #{tpu_custom_call.1} parent=1 // pred_region
      %vm68 = vcmask 56320
      %69 = vst.msk [vmem:[#allocation7] sm:$0xff] %vm68, 0.0
    $region21: #{tpu_custom_call.1} parent=1 // pred_fallthru
      _
    %v70 = vld [vmem:[#allocation2] sm:$0xff]
    %v71 = vld [vmem:[#allocation5] sm:$0xff]
    %v72 = vmax.f32 %v70, 0.0
    %v73 = vmul.f32 %v70, %v71
    %v74 = vsub.f32 %v72, %v73
    %v75 = vand.u32 2147483647, %v70
    %v76 = vsub.f32 0.0, %v75
    %v77 = vmul.f32 %v76, 1.442695
    %v78 = vpow.pop %v77
    %v79 = vadd.f32 %v78, 1.0
    %v80 = vlog2.pop %v79
    %v81 = vmul.f32 %v80, 0.6931472
    %v82 = vmul.f32 -0.5, %v78
    %v83 = vadd.f32 %v82, 1.0
    %v84 = vmul.f32 %v83, %v78
    %v85 = vand.u32 2147483647, %v78
    %vm86 = vcmp.lt.f32.partialorder %v85, 0.0004427343
    %v87 = vsel %vm86, %v84, %v81
    %v88 = vadd.f32 %v74, %v87
    %s89 = sadd.s32 0, 0
    %s90 = smul.u32 %s89, 8
    %s91 = sadd.s32 %s90, 8
    %p92 = scmp.le.s32.totalorder %s91, 2
    // Predicated region
    $region22: #{tpu_custom_call.1} parent=1 // pred_check
      %p93 = pneg %p92
    $region23: #{tpu_custom_call.1} parent=1 // pred_check_branch
      %95 = sbr.rel (%p93) target = $region25
    $region24: #{tpu_custom_call.1} parent=1 // pred_region
      %v96 = vld [vmem:[#allocation7] sm:$0xff]
      %v97 = vadd.f32 %v88, 0.0
      %v98 = vadd.f32 %v96, %v97
      %vm99 = vcmask 56320
      %100 = vst.msk [vmem:[#allocation7] sm:$0xff] %vm99, %v98
    $region25: #{tpu_custom_call.1} parent=1 // pred_fallthru
      _
    %p101 = scmp.gt.s32.totalorder %s91, 2
    // Predicated region
    $region26: #{tpu_custom_call.1} parent=1 // pred_check
      %p102 = pneg %p101
    $region27: #{tpu_custom_call.1} parent=1 // pred_check_branch
      %104 = sbr.rel (%p102) target = $region29
    $region28: #{tpu_custom_call.1} parent=1 // pred_region
      %v105 = vlaneseq
      %v106 = vshrl.u32 %v105, 7
      %v107 = vstv %s90
      %v108 = vadd.s32 %v106, %v107
      %vm109 = vcmp.lt.s32.totalorder %v108, 2
      %v110 = vsel %vm109, %v88, 0.0
      %v111 = vld [vmem:[#allocation7] sm:$0xff]
      %v112 = vadd.f32 %v110, 0.0
      %v113 = vadd.f32 %v111, %v112
      %vm114 = vcmask 56320
      %115 = vst.msk [vmem:[#allocation7] sm:$0xff] %vm114, %v113
    $region29: #{tpu_custom_call.1} parent=1 // pred_fallthru
      _
    // Predicated region
    $region30: #{tpu_custom_call.1} parent=1 // pred_check
      _
    $region31: #{tpu_custom_call.1} parent=1 // pred_check_branch
      %117 = sbr.rel (0) target = $region33
    $region32: #{tpu_custom_call.1} parent=1 // pred_region
      %s119 = ssub.s32 128, 128
      %120 = vsyncadd [#allocation4], %s119
      %s122 = sshll.u32 [#allocation7], 4
      %s123 = int_to_ptr.vmem [resolvable:$true] %s122
      %125 = dma.vmem_to_hbm [thread:$0]  %s123, 128, %s2, [#allocation4]
    $region33: #{tpu_custom_call.1} parent=1 // pred_fallthru
      _
    // Predicated region
    $region34: #{tpu_custom_call.1} parent=1 // pred_check
      _
    $region35: #{tpu_custom_call.1} parent=1 // pred_check_branch
      %127 = sbr.rel (0) target = $region37
    $region36: #{tpu_custom_call.1} parent=1 // pred_region
      %128 = dma.done [#allocation4], 128
    $region37: #{tpu_custom_call.1} parent=1 // pred_fallthru
      _
    %129 = vsyncpa [#allocation3], 1
    %130 = vsyncpa [#allocation6], 1
    %131 = vsyncpa [#allocation4], 1

</llo_original>
